<compile_context>
chip_gen: v6e
topology: v6e:2x2x1
jax: 0.10.0
libtpu: 0.0.40
codegen_flags: <defaults>
</compile_context>

<pallas_src>
import math

import jax
import jax.numpy as jnp
from jax.experimental import pallas as pl
from jax.experimental.pallas import tpu as pltpu


def _copy_block_kernel(x_ref, o_ref):
    # Lane-/sublane-dense full-block copy; the flatten was already done (for
    # free) by the wrapper-side reshape, so this is one unmasked wide store.
    o_ref[...] = x_ref[...]


_TARGET_BLOCK_BYTES = 2 << 20  # ~2 MiB/block -> ~8 MiB live with in+out double-buffering
_MAX_LANES = 4096              # cap contiguous lanes per row; keeps many row-blocks for megacore


def _sublane_multiple(dtype) -> int:
    itemsize = jnp.dtype(dtype).itemsize
    return max(8, 32 // max(1, itemsize))  # 8 (f32), 16 (bf16), 32 (int8)


def _slab_tiling(total: int, dtype):
    """Pick a (R, L) slab view and (tr, L) block for a contiguous copy.

    Returns ((R, L), (tr, L), num_row_blocks) or None if `total` has no
    128-multiple factor (caller uses the unaligned fallback).
    """
    itemsize = jnp.dtype(dtype).itemsize
    sub = _sublane_multiple(dtype)

    # Lane dim: largest multiple of 128 dividing `total`, capped at _MAX_LANES,
    # preferring a choice that leaves >= `sub` rows so sublanes are dense too.
    lane = None
    start = min(_MAX_LANES, (total // 128) * 128)
    for want_rows in (sub, 1):
        for cand in range(start, 0, -128):
            if total % cand == 0 and (total // cand) >= want_rows:
                lane = cand
                break
        if lane is not None:
            break
    if lane is None:
        return None

    rows = total // lane

    # Row tile: byte-budgeted, multiple of `sub`, preferably dividing `rows`.
    budget_rows = max(sub, _TARGET_BLOCK_BYTES // (lane * itemsize))
    if rows <= budget_rows:
        tr = rows  # full row extent ((8,128)-rule escape hatch)
    else:
        tr = None
        t = (budget_rows // sub) * sub
        while t >= sub:
            if rows % t == 0:
                tr = t
                break
            t -= sub
        if tr is None:
            # Non-dividing tile: last block is partial; Pallas masks OOB writes.
            tr = (budget_rows // sub) * sub

    return (rows, lane), (tr, lane), pl.cdiv(rows, tr)


def _row_tiling(n: int, f: int, dtype):
    """Fallback tiling for non-128-aligned flat sizes: tile (N, F) by rows."""
    itemsize = jnp.dtype(dtype).itemsize
    sub = _sublane_multiple(dtype)
    budget_rows = max(1, _TARGET_BLOCK_BYTES // (f * itemsize))
    if n <= budget_rows:
        tr = n  # full extent
    else:
        tr = max(sub, (budget_rows // sub) * sub)
    return (tr, f), pl.cdiv(n, tr)


def flatten(x):
    """Pallas equivalent of torch Flatten().forward(x) = x.view(x.size(0), -1)."""
    N = x.shape[0]
    F = math.prod(x.shape[1:])
    total = N * F

    # Free, byte-identical view for a contiguous input: this IS the flatten.
    x2 = x.reshape(N, F)

    slab = _slab_tiling(total, x.dtype)
    if slab is not None:
        (R, L), (tr, tl), nblocks = slab
        out = pl.pallas_call(
            _copy_block_kernel,
            out_shape=jax.ShapeDtypeStruct((R, L), x.dtype),
            grid=(nblocks,),
            in_specs=[pl.BlockSpec((tr, tl), lambda i: (i, 0))],
            out_specs=pl.BlockSpec((tr, tl), lambda i: (i, 0)),
            compiler_params=pltpu.CompilerParams(
                dimension_semantics=("parallel",),
            ),
        )(x2.reshape(R, L))
        return out.reshape(N, F)

    # Fallback: flat size not 128-aligned. Tile rows of (N, F) with full-F
    # lane blocks (full-extent escape hatch) and a byte-budgeted row tile.
    # TODO(synk): for very large non-128-aligned F, split into a 128-aligned
    # main region plus a small remainder call instead of full-F blocks.
    (tr, tl), nblocks = _row_tiling(N, F, x.dtype)
    return pl.pallas_call(
        _copy_block_kernel,
        out_shape=jax.ShapeDtypeStruct((N, F), x.dtype),
        grid=(nblocks,),
        in_specs=[pl.BlockSpec((tr, tl), lambda i: (i, 0))],
        out_specs=pl.BlockSpec((tr, tl), lambda i: (i, 0)),
        compiler_params=pltpu.CompilerParams(
            dimension_semantics=("parallel",),
        ),
    )(x2)


if __name__ == "__main__":
    # Flatten() has no parameters; nothing to initialize.
    key = jax.random.PRNGKey(0)
    N, C, H, W = 2, 4, 16, 16  # small NCHW input, consistent with omniglot features
    x = jax.random.normal(key, (N, C, H, W), dtype=jnp.float32)

    flatten_jit = jax.jit(flatten)
    out = jax.block_until_ready(flatten_jit(x))

    # Reference: exact semantics of torch .view(N, -1) for contiguous NCHW.
    expected = x.reshape(N, -1)
    assert out.shape == (N, C * H * W), out.shape
    assert out.dtype == x.dtype
    assert jnp.array_equal(out, expected), "Pallas flatten mismatch vs reference"

    print("KERNEL_OK")
</pallas_src>

<mosaic_0001>
module attributes {stable_mosaic.version = 11 : i64} {
  func.func @_copy_block_kernel(%arg0: i32, %arg1: memref<8x256xf32, #tpu.memory_space<vmem>>, %arg2: memref<8x256xf32, #tpu.memory_space<vmem>>) attributes {dimension_semantics = [#tpu.dimension_semantics<parallel>], iteration_bounds = array<i64: 1>, scalar_prefetch = 0 : i64, scratch_operands = 0 : i64, tpu.core_type = #tpu.core_type<tc>, window_params = [{transform_indices = @transform_0, window_bounds = array<i64: 8, 256>}, {transform_indices = @transform_1, window_bounds = array<i64: 8, 256>}]} {
    %c0 = arith.constant 0 : index
    %c0_0 = arith.constant 0 : index
    %0 = vector.load %arg1[%c0, %c0_0] : memref<8x256xf32, #tpu.memory_space<vmem>>, vector<8x256xf32>
    %c0_1 = arith.constant 0 : index
    %c0_2 = arith.constant 0 : index
    %1 = vector.load %arg2[%c0_1, %c0_2] : memref<8x256xf32, #tpu.memory_space<vmem>>, vector<8x256xf32>
    tpu.vector_store %arg2[%c0_1, %c0_2], %0 {strides = array<i32>} : memref<8x256xf32, #tpu.memory_space<vmem>>, vector<8x256xf32>,
    return
  }
  func.func @transform_0(%arg0: i32) -> (i32, i32) {
    %c0_i32 = arith.constant 0 : i32
    %c0_i32_0 = arith.constant 0 : i32
    return %arg0, %c0_i32 : i32, i32
  }
  func.func @transform_1(%arg0: i32) -> (i32, i32) {
    %c0_i32 = arith.constant 0 : i32
    %c0_i32_0 = arith.constant 0 : i32
    return %arg0, %c0_i32 : i32, i32
  }
}

</mosaic_0001>

<llo_original>
// kernel: flatten.1
$region0: #{flatten.1}
  #allocation0 [shape = 'u32[]', space=smem, size = 0x4, offset = 0x4, fixed_abs, tag = 'smem constant byte address 0x4 - core index']
  #allocation1 [shape = 'u32[144,128]{1,0:T(1,128)}', space=vmem, size = 0x12000, scoped, tag = 'internal scratch']
  %s0 = inlined_call_operand.vmem [shape: f32[8,256], index: 0, kind: input, shape index: {}]
  %s1 = inlined_call_operand.vmem [shape: f32[8,256], index: 1, kind: output, shape index: {}]
  %s2 = sld [smem:[#allocation0]]
  $region14: #{flatten.1} parent=0
    _
  %s4 = ssub.s32 1, %s2
  %s5 = scalar_select 0, %s4, %s2
  // Predicated region
  $region2: #{flatten.1} parent=0 // pred_check
    _
  $region3: #{flatten.1} parent=0 // pred_check_branch
    %7 = sbr.rel (0) target = $region5
  $region4: #{flatten.1} parent=0 // pred_region
    _
  $region5: #{flatten.1} parent=0 // pred_fallthru
    _
  %v8 = vld [vmem:[%s0] sm:$0xff]
  %v9 = vld [vmem:[%s0 + $0x8] sm:$0xff]
  %10 = vst [vmem:[%s1] sm:$0xff] %v8
  %11 = vst [vmem:[%s1 + $0x8] sm:$0xff] %v9
  // Predicated region
  $region6: #{flatten.1} parent=0 // pred_check
    _
  $region7: #{flatten.1} parent=0 // pred_check_branch
    %13 = sbr.rel (0) target = $region9
  $region8: #{flatten.1} parent=0 // pred_region
    _
  $region9: #{flatten.1} parent=0 // pred_fallthru
    _
  // Predicated region
  $region10: #{flatten.1} parent=0 // pred_check
    _
  $region11: #{flatten.1} parent=0 // pred_check_branch
    %15 = sbr.rel (0) target = $region13
  $region12: #{flatten.1} parent=0 // pred_region
    _
  $region13: #{flatten.1} parent=0 // pred_fallthru
    _

</llo_original>
